<compile_context>
chip_gen: v6e
topology: v6e:2x2x1
jax: 0.10.0
libtpu: 0.0.40
codegen_flags: <defaults>
</compile_context>

<pallas_src>
import functools

import jax
import jax.numpy as jnp
from jax import lax
from jax.experimental import pallas as pl
from jax.experimental.pallas import tpu as pltpu


def _round_up(x, m):
    return (x + m - 1) // m * m


def _tpp_kernel(x_mm_ref, x_res_ref, w_ref, b_ref, o_ref, acc_ref, *,
                matmul_dtype):
    k = pl.program_id(2)

    @pl.when(k == 0)
    def _():
        acc_ref[...] = jnp.zeros_like(acc_ref)

    # y[m, n] += sum_k x[m, k] * W[n, k]   (nn.Linear weight is (out, in)),
    # i.e. contract dim 1 of x with dim 1 of W -> no wrapper-side transpose.
    x = x_mm_ref[...].astype(matmul_dtype)
    w = w_ref[...].astype(matmul_dtype)
    acc_ref[...] += lax.dot_general(
        x, w,
        dimension_numbers=(((1,), (1,)), ((), ())),
        preferred_element_type=jnp.float32)

    @pl.when(k == pl.num_programs(2) - 1)
    def _():
        # Fused epilogue on the VPU: residual add + bias broadcast.
        o_ref[...] = (x_res_ref[...].astype(jnp.float32)
                      + acc_ref[...]
                      + b_ref[...]).astype(o_ref.dtype)


def tpp_forward(logits, weight, bias, *, matmul_dtype=jnp.float32):
    """logits: (B, D); weight: (D, D) in nn.Linear (out, in) layout; bias: (D,)."""
    B, D = logits.shape
    orig_dtype = logits.dtype

    # ---- lane-dense padding of the feature dim + tile selection ----------
    d_pad = _round_up(D, 128)
    t_feat = 512 if d_pad >= 512 else d_pad          # tn == tk, multiple of 128
    d_pad = _round_up(d_pad, t_feat)

    tm = 256 if B >= 256 else _round_up(B, 8)
    b_pad = _round_up(B, tm)

    # TODO(synk): for production sizes, store the parameters already padded to
    # (d_pad, d_pad) so this per-call jnp.pad of the weight disappears.
    x_p = jnp.pad(logits, ((0, b_pad - B), (0, d_pad - D)))
    w_p = jnp.pad(weight, ((0, d_pad - D), (0, d_pad - D)))
    b_p = jnp.pad(bias, (0, d_pad - D)).reshape(1, d_pad)

    grid = (b_pad // tm, d_pad // t_feat, d_pad // t_feat)

    kernel = functools.partial(_tpp_kernel, matmul_dtype=matmul_dtype)

    out = pl.pallas_call(
        kernel,
        out_shape=jax.ShapeDtypeStruct((b_pad, d_pad), orig_dtype),
        grid_spec=pltpu.PrefetchScalarGridSpec(
            num_scalar_prefetch=0,
            grid=grid,
            in_specs=[
                # x tile feeding the MXU: block (i, k)
                pl.BlockSpec((tm, t_feat), lambda i, j, k: (i, k)),
                # x tile for the residual add: block (i, j) (constant over k)
                pl.BlockSpec((tm, t_feat), lambda i, j, k: (i, j)),
                # weight tile in (out=n, in=k) layout: block (j, k)
                pl.BlockSpec((t_feat, t_feat), lambda i, j, k: (j, k)),
                # bias tile: block (0, j)
                pl.BlockSpec((1, t_feat), lambda i, j, k: (0, j)),
            ],
            out_specs=pl.BlockSpec((tm, t_feat), lambda i, j, k: (i, j)),
            scratch_shapes=[pltpu.VMEM((tm, t_feat), jnp.float32)],
        ),
        compiler_params=pltpu.CompilerParams(
            dimension_semantics=("parallel", "parallel", "arbitrary")),
        cost_estimate=pl.CostEstimate(
            flops=2 * b_pad * d_pad * d_pad,
            transcendentals=0,
            bytes_accessed=4 * (2 * b_pad * d_pad + d_pad * d_pad + d_pad)),
    )(x_p, x_p, w_p, b_p)

    return out[:B, :D]


def tpp_reference(logits, weight, bias):
    return logits + (logits @ weight.T + bias)


if __name__ == "__main__":
    # Small shapes consistent with the module: batch=8, input_dim=32.
    B, D = 8, 32
    k_x, k_w, k_b = jax.random.split(jax.random.PRNGKey(0), 3)
    bound = 1.0 / (D ** 0.5)
    logits = jax.random.normal(k_x, (B, D), dtype=jnp.float32)
    weight = jax.random.uniform(k_w, (D, D), jnp.float32, -bound, bound)
    bias = jax.random.uniform(k_b, (D,), jnp.float32, -bound, bound)

    out = jax.block_until_ready(tpp_forward(logits, weight, bias))
    ref = tpp_reference(logits, weight, bias)
    assert jnp.allclose(out, ref, atol=1e-5, rtol=1e-5), "mismatch (small)"

    # Larger, non-aligned shape to exercise the tiled (i, j, k) path.
    B2, D2 = 40, 640
    k_x2, k_w2, k_b2 = jax.random.split(jax.random.PRNGKey(1), 3)
    bound2 = 1.0 / (D2 ** 0.5)
    logits2 = jax.random.normal(k_x2, (B2, D2), dtype=jnp.float32)
    weight2 = jax.random.uniform(k_w2, (D2, D2), jnp.float32, -bound2, bound2)
    bias2 = jax.random.uniform(k_b2, (D2,), jnp.float32, -bound2, bound2)

    out2 = jax.block_until_ready(tpp_forward(logits2, weight2, bias2))
    ref2 = tpp_reference(logits2, weight2, bias2)
    assert jnp.allclose(out2, ref2, atol=1e-4, rtol=1e-4), "mismatch (tiled)"

    print("KERNEL_OK")
</pallas_src>

<mosaic_0001>
module attributes {stable_mosaic.version = 11 : i64} {
  func.func @_tpp_kernel(%arg0: i32, %arg1: i32, %arg2: i32, %arg3: memref<8x128xf32, #tpu.memory_space<vmem>>, %arg4: memref<8x128xf32, #tpu.memory_space<vmem>>, %arg5: memref<128x128xf32, #tpu.memory_space<vmem>>, %arg6: memref<1x128xf32, #tpu.memory_space<vmem>>, %arg7: memref<8x128xf32, #tpu.memory_space<vmem>>, %arg8: memref<8x128xf32, #tpu.memory_space<vmem>>) attributes {dimension_semantics = [#tpu.dimension_semantics<parallel>, #tpu.dimension_semantics<parallel>, #tpu.dimension_semantics<arbitrary>], iteration_bounds = array<i64: 1, 1, 1>, scalar_prefetch = 0 : i64, scratch_operands = 1 : i64, tpu.core_type = #tpu.core_type<tc>, window_params = [{transform_indices = @transform_0, window_bounds = array<i64: 8, 128>}, {transform_indices = @transform_1, window_bounds = array<i64: 8, 128>}, {transform_indices = @transform_2, window_bounds = array<i64: 128, 128>}, {transform_indices = @transform_3, window_bounds = array<i64: 1, 128>}, {transform_indices = @transform_4, window_bounds = array<i64: 8, 128>}]} {
    %c0_i32 = arith.constant 0 : i32
    %0 = arith.cmpi eq, %arg2, %c0_i32 : i32
    %1 = arith.extui %0 : i1 to i32
    %c0_i32_0 = arith.constant 0 : i32
    %2 = arith.cmpi ne, %1, %c0_i32_0 : i32
    scf.if %2 {
      %cst_10 = arith.constant 0.000000e+00 : f32
      %12 = vector.broadcast %cst_10 : f32 to vector<8x128xf32>
      %c0_11 = arith.constant 0 : index
      %c0_12 = arith.constant 0 : index
      %13 = vector.load %arg8[%c0_11, %c0_12] : memref<8x128xf32, #tpu.memory_space<vmem>>, vector<8x128xf32>
      tpu.vector_store %arg8[%c0_11, %c0_12], %12 {strides = array<i32>} : memref<8x128xf32, #tpu.memory_space<vmem>>, vector<8x128xf32>,
    } else {
    }
    %c0 = arith.constant 0 : index
    %c0_1 = arith.constant 0 : index
    %3 = vector.load %arg3[%c0, %c0_1] : memref<8x128xf32, #tpu.memory_space<vmem>>, vector<8x128xf32>
    %c0_2 = arith.constant 0 : index
    %c0_3 = arith.constant 0 : index
    %4 = vector.load %arg5[%c0_2, %c0_3] : memref<128x128xf32, #tpu.memory_space<vmem>>, vector<128x128xf32>
    %c0_4 = arith.constant 0 : index
    %c0_5 = arith.constant 0 : index
    %5 = vector.load %arg8[%c0_4, %c0_5] : memref<8x128xf32, #tpu.memory_space<vmem>>, vector<8x128xf32>
    %cst = arith.constant dense<0.000000e+00> : vector<8x128xf32>
    %6 = tpu.matmul %3, %4, %cst {dimension_numbers = #tpu.dot_dimension_numbers<[1], [1], [0], [0], [0, 0, 1, 0], [], []>} : vector<8x128xf32>, vector<128x128xf32>, vector<8x128xf32> -> vector<8x128xf32>
    %7 = arith.addf %5, %6 : vector<8x128xf32>
    %c0_6 = arith.constant 0 : index
    %c0_7 = arith.constant 0 : index
    %8 = vector.load %arg8[%c0_6, %c0_7] : memref<8x128xf32, #tpu.memory_space<vmem>>, vector<8x128xf32>
    tpu.vector_store %arg8[%c0_6, %c0_7], %7 {strides = array<i32>} : memref<8x128xf32, #tpu.memory_space<vmem>>, vector<8x128xf32>,
    %c0_i32_8 = arith.constant 0 : i32
    %9 = arith.cmpi eq, %arg2, %c0_i32_8 : i32
    %10 = arith.extui %9 : i1 to i32
    %c0_i32_9 = arith.constant 0 : i32
    %11 = arith.cmpi ne, %10, %c0_i32_9 : i32
    scf.if %11 {
      %c0_10 = arith.constant 0 : index
      %c0_11 = arith.constant 0 : index
      %12 = vector.load %arg4[%c0_10, %c0_11] : memref<8x128xf32, #tpu.memory_space<vmem>>, vector<8x128xf32>
      %c0_12 = arith.constant 0 : index
      %c0_13 = arith.constant 0 : index
      %13 = vector.load %arg8[%c0_12, %c0_13] : memref<8x128xf32, #tpu.memory_space<vmem>>, vector<8x128xf32>
      %14 = arith.addf %12, %13 : vector<8x128xf32>
      %c0_14 = arith.constant 0 : index
      %c0_15 = arith.constant 0 : index
      %15 = vector.load %arg6[%c0_14, %c0_15] : memref<1x128xf32, #tpu.memory_space<vmem>>, vector<1x128xf32>
      %16 = vector.broadcast %15 : vector<1x128xf32> to vector<8x128xf32>
      %17 = arith.addf %14, %16 : vector<8x128xf32>
      %c0_16 = arith.constant 0 : index
      %c0_17 = arith.constant 0 : index
      %18 = vector.load %arg7[%c0_16, %c0_17] : memref<8x128xf32, #tpu.memory_space<vmem>>, vector<8x128xf32>
      tpu.vector_store %arg7[%c0_16, %c0_17], %17 {strides = array<i32>} : memref<8x128xf32, #tpu.memory_space<vmem>>, vector<8x128xf32>,
    } else {
    }
    return
  }
  func.func @transform_0(%arg0: i32, %arg1: i32, %arg2: i32) -> (i32, i32) {
    %c0_i32 = arith.constant 0 : i32
    return %arg0, %arg2 : i32, i32
  }
  func.func @transform_1(%arg0: i32, %arg1: i32, %arg2: i32) -> (i32, i32) {
    %c0_i32 = arith.constant 0 : i32
    return %arg0, %arg1 : i32, i32
  }
  func.func @transform_2(%arg0: i32, %arg1: i32, %arg2: i32) -> (i32, i32) {
    %c0_i32 = arith.constant 0 : i32
    return %arg1, %arg2 : i32, i32
  }
  func.func @transform_3(%arg0: i32, %arg1: i32, %arg2: i32) -> (i32, i32) {
    %c0_i32 = arith.constant 0 : i32
    %c0_i32_0 = arith.constant 0 : i32
    return %c0_i32, %arg1 : i32, i32
  }
  func.func @transform_4(%arg0: i32, %arg1: i32, %arg2: i32) -> (i32, i32) {
    %c0_i32 = arith.constant 0 : i32
    return %arg0, %arg1 : i32, i32
  }
}

</mosaic_0001>

<llo_original>
// kernel: tpu_custom_call.1
$region0: #{tpu_custom_call.1}
  #allocation0 [shape = 'u32[]', space=smem, size = 0x4, offset = 0x4, fixed_abs, tag = 'smem constant byte address 0x4 - core index']
  #allocation1 [shape = 'u32[144,128]{1,0:T(1,128)}', space=vmem, size = 0x12000, scoped, tag = 'internal scratch']
  #allocation2 [shape = 'f32[8,128]{1,0:T(8,128)}', space=vmem, size = 0x1000, scoped, tag = 'scratch operand']
  %s0 = inlined_call_operand.hbm [shape: f32[8,128], index: 0, kind: input, shape index: {}]
  %s1 = inlined_call_operand.hbm [shape: f32[8,128], index: 1, kind: input, shape index: {}]
  %s2 = inlined_call_operand.hbm [shape: f32[128,128], index: 2, kind: input, shape index: {}]
  %s3 = inlined_call_operand.vmem [shape: f32[1,128], index: 3, kind: input, shape index: {}]
  %s4 = inlined_call_operand.hbm [shape: f32[8,128], index: 4, kind: output, shape index: {}]
  %s5 = sld [smem:[#allocation0]]
  $region46: #{tpu_custom_call.1} parent=0
    _
  %s7 = ssub.s32 1, %s5
  %s8 = scalar_select 0, %s7, %s5
  $region1: #{tpu_custom_call.1} parent=0
    #allocation3 [shape = 'u8[4096]{0}', space=vmem, size = 0x1000, scoped, tag = 'input window, operand 0, single buffered']
    #allocation4 [shape = 's32[1]{0}', space=sflag, size = 0x4, scoped, tag = 'scoped memory for tpu_custom_call.1']
    #allocation5 [shape = 's32[1]{0}', space=sflag, size = 0x4, scoped, tag = 'scoped memory for tpu_custom_call.1']
    #allocation6 [shape = 'u8[4096]{0}', space=vmem, size = 0x1000, scoped, tag = 'input window, operand 1, single buffered']
    #allocation7 [shape = 's32[1]{0}', space=sflag, size = 0x4, scoped, tag = 'scoped memory for tpu_custom_call.1']
    #allocation8 [shape = 'u8[65536]{0}', space=vmem, size = 0x10000, scoped, tag = 'input window, operand 2, single buffered']
    #allocation9 [shape = 'u8[4096]{0}', space=vmem, size = 0x1000, scoped, tag = 'output window, operand 0, single buffered']
    %9 = vsyncpa [#allocation4], 0
    %10 = vsyncpa [#allocation7], 0
    %11 = vsyncpa [#allocation5], 0
    // Predicated region
    $region2: #{tpu_custom_call.1} parent=1 // pred_check
      _
    $region3: #{tpu_custom_call.1} parent=1 // pred_check_branch
      %13 = sbr.rel (0) target = $region5
    $region4: #{tpu_custom_call.1} parent=1 // pred_region
      %s15 = ssub.s32 128, 128
      %16 = vsyncadd [#allocation4], %s15
      %s18 = sshll.u32 [#allocation3], 4
      %s19 = int_to_ptr.vmem [resolvable:$true] %s18
      %21 = dma.hbm_to_vmem [thread:$0]  %s0, 128, %s19, [#allocation4]
    $region5: #{tpu_custom_call.1} parent=1 // pred_fallthru
      _
    // Predicated region
    $region6: #{tpu_custom_call.1} parent=1 // pred_check
      _
    $region7: #{tpu_custom_call.1} parent=1 // pred_check_branch
      %23 = sbr.rel (0) target = $region9
    $region8: #{tpu_custom_call.1} parent=1 // pred_region
      %s25 = ssub.s32 128, 128
      %26 = vsyncadd [#allocation7], %s25
      %s28 = sshll.u32 [#allocation6], 4
      %s29 = int_to_ptr.vmem [resolvable:$true] %s28
      %31 = dma.hbm_to_vmem [thread:$0]  %s1, 128, %s29, [#allocation7]
    $region9: #{tpu_custom_call.1} parent=1 // pred_fallthru
      _
    // Predicated region
    $region10: #{tpu_custom_call.1} parent=1 // pred_check
      _
    $region11: #{tpu_custom_call.1} parent=1 // pred_check_branch
      %33 = sbr.rel (0) target = $region13
    $region12: #{tpu_custom_call.1} parent=1 // pred_region
      %s35 = ssub.s32 2048, 2048
      %36 = vsyncadd [#allocation7], %s35
      %s37 = sshll.u32 [#allocation8], 4
      %s38 = int_to_ptr.vmem [resolvable:$true] %s37
      %43 = dma.hbm_to_vmem [thread:$0]  %s2, 2048, %s38, [#allocation7], 128, 128, 8
    $region13: #{tpu_custom_call.1} parent=1 // pred_fallthru
      _
    // Predicated region
    $region14: #{tpu_custom_call.1} parent=1 // pred_check
      _
    $region15: #{tpu_custom_call.1} parent=1 // pred_check_branch
      %45 = sbr.rel (0) target = $region17
    $region16: #{tpu_custom_call.1} parent=1 // pred_region
      _
    $region17: #{tpu_custom_call.1} parent=1 // pred_fallthru
      _
    // Predicated region
    $region18: #{tpu_custom_call.1} parent=1 // pred_check
      _
    $region19: #{tpu_custom_call.1} parent=1 // pred_check_branch
      %47 = sbr.rel (0) target = $region21
    $region20: #{tpu_custom_call.1} parent=1 // pred_region
      %48 = dma.done [#allocation4], 128
    $region21: #{tpu_custom_call.1} parent=1 // pred_fallthru
      _
    // Predicated region
    $region22: #{tpu_custom_call.1} parent=1 // pred_check
      _
    $region23: #{tpu_custom_call.1} parent=1 // pred_check_branch
      %50 = sbr.rel (0) target = $region25
    $region24: #{tpu_custom_call.1} parent=1 // pred_region
      %51 = dma.done [#allocation7], 128
    $region25: #{tpu_custom_call.1} parent=1 // pred_fallthru
      _
    // Predicated region
    $region26: #{tpu_custom_call.1} parent=1 // pred_check
      _
    $region27: #{tpu_custom_call.1} parent=1 // pred_check_branch
      %53 = sbr.rel (0) target = $region29
    $region28: #{tpu_custom_call.1} parent=1 // pred_region
      %54 = dma.done [#allocation7], 2048
    $region29: #{tpu_custom_call.1} parent=1 // pred_fallthru
      _
    %p55 = scmp.eq.s32.totalorder 0, 0
    // Predicated region
    $region30: #{tpu_custom_call.1} parent=1 // pred_check
      %p56 = pneg %p55
    $region31: #{tpu_custom_call.1} parent=1 // pred_check_branch
      %58 = sbr.rel (%p56) target = $region33
    $region32: #{tpu_custom_call.1} parent=1 // pred_region
      %59 = vst [vmem:[#allocation2] sm:$0xff] 0.0
    $region33: #{tpu_custom_call.1} parent=1 // pred_fallthru
      _
    %v60 = vld [vmem:[#allocation3] sm:$0xff]
    %v61 = vld [vmem:[#allocation8] sm:$0xff]
    %v62 = vld [vmem:[#allocation8 + $0x8] sm:$0xff]
    %v63 = vld [vmem:[#allocation8 + $0x10] sm:$0xff]
    %v64 = vld [vmem:[#allocation8 + $0x18] sm:$0xff]
    %v65 = vld [vmem:[#allocation8 + $0x20] sm:$0xff]
    %v66 = vld [vmem:[#allocation8 + $0x28] sm:$0xff]
    %v67 = vld [vmem:[#allocation8 + $0x30] sm:$0xff]
    %v68 = vld [vmem:[#allocation8 + $0x38] sm:$0xff]
    %v69 = vld [vmem:[#allocation8 + $0x40] sm:$0xff]
    %v70 = vld [vmem:[#allocation8 + $0x48] sm:$0xff]
    %v71 = vld [vmem:[#allocation8 + $0x50] sm:$0xff]
    %v72 = vld [vmem:[#allocation8 + $0x58] sm:$0xff]
    %v73 = vld [vmem:[#allocation8 + $0x60] sm:$0xff]
    %v74 = vld [vmem:[#allocation8 + $0x68] sm:$0xff]
    %v75 = vld [vmem:[#allocation8 + $0x70] sm:$0xff]
    %v76 = vld [vmem:[#allocation8 + $0x78] sm:$0xff]
    %v77 = vld [vmem:[#allocation2] sm:$0xff]
    %78 = vmatprep.subr.mxu0 0.0
    %79 = vmatpush1.xpose.msra.mxu0 %v76
    %80 = vmatprep.subr.mxu0 0.0
    %81 = vmatpush1.xpose.msra.mxu0 %v75
    %82 = vmatprep.subr.mxu0 0.0
    %83 = vmatpush1.xpose.msra.mxu0 %v74
    %84 = vmatprep.subr.mxu0 0.0
    %85 = vmatpush1.xpose.msra.mxu0 %v73
    %86 = vmatprep.subr.mxu0 0.0
    %87 = vmatpush1.xpose.msra.mxu0 %v72
    %88 = vmatprep.subr.mxu0 0.0
    %89 = vmatpush1.xpose.msra.mxu0 %v71
    %90 = vmatprep.subr.mxu0 0.0
    %91 = vmatpush1.xpose.msra.mxu0 %v70
    %92 = vmatprep.subr.mxu0 0.0
    %93 = vmatpush1.xpose.msra.mxu0 %v69
    %94 = vmatprep.subr.mxu0 0.0
    %95 = vmatpush1.xpose.msra.mxu0 %v68
    %96 = vmatprep.subr.mxu0 0.0
    %97 = vmatpush1.xpose.msra.mxu0 %v67
    %98 = vmatprep.subr.mxu0 0.0
    %99 = vmatpush1.xpose.msra.mxu0 %v66
    %100 = vmatprep.subr.mxu0 0.0
    %101 = vmatpush1.xpose.msra.mxu0 %v65
    %102 = vmatprep.subr.mxu0 0.0
    %103 = vmatpush1.xpose.msra.mxu0 %v64
    %104 = vmatprep.subr.mxu0 0.0
    %105 = vmatpush1.xpose.msra.mxu0 %v63
    %106 = vmatprep.subr.mxu0 0.0
    %107 = vmatpush1.xpose.msra.mxu0 %v62
    %108 = vmatprep.subr.mxu0 0.0
    %109 = vmatpush1.xpose.msra.mxu0 %v61
    %110 = vmatprep.subr.mxu0 0.0
    %111 = vmatpush2.xpose.msra.mxu0 0.0
    %112 = vmatprep.subr.mxu0 0.0
    %113 = vmatpush2.xpose.msra.mxu0 0.0
    %114 = vmatprep.subr.mxu0 0.0
    %115 = vmatpush2.xpose.msra.mxu0 0.0
    %116 = vmatprep.subr.mxu0 0.0
    %117 = vmatpush2.xpose.msra.mxu0 0.0
    %118 = vmatprep.subr.mxu0 0.0
    %119 = vmatpush2.xpose.msra.mxu0 0.0
    %120 = vmatprep.subr.mxu0 0.0
    %121 = vmatpush2.xpose.msra.mxu0 0.0
    %122 = vmatprep.subr.mxu0 0.0
    %123 = vmatpush2.xpose.msra.mxu0 0.0
    %124 = vmatprep.subr.mxu0 0.0
    %125 = vmatpush2.xpose.msra.mxu0 0.0
    %126 = vmatprep.subr.mxu0 0.0
    %127 = vmatpush2.xpose.msra.mxu0 0.0
    %128 = vmatprep.subr.mxu0 0.0
    %129 = vmatpush2.xpose.msra.mxu0 0.0
    %130 = vmatprep.subr.mxu0 0.0
    %131 = vmatpush2.xpose.msra.mxu0 0.0
    %132 = vmatprep.subr.mxu0 0.0
    %133 = vmatpush2.xpose.msra.mxu0 0.0
    %134 = vmatprep.subr.mxu0 0.0
    %135 = vmatpush2.xpose.msra.mxu0 0.0
    %136 = vmatprep.subr.mxu0 0.0
    %137 = vmatpush2.xpose.msra.mxu0 0.0
    %138 = vmatprep.subr.mxu0 0.0
    %139 = vmatpush2.xpose.msra.mxu0 0.0
    %140 = vmatprep.subr.mxu0 0.0
    %141 = vmatpush2.xpose.msra.mxu0 0.0
    %142 = vmatprep.mubr.f32.mxu0 0.0
    %143 = vmatmul.mubr.f32.gmra.mxu0 %v60
    %v144 = vpop.f32.mrf.mxu0
    %v145 = vadd.f32 0.0, %v144
    %v146 = vpop.f32.mrf.mxu0
    %147 = vdwg.mxu0
    %v148 = vadd.f32 %v77, %v145
    %149 = vst [vmem:[#allocation2] sm:$0xff] %v148
    // Predicated region
    $region34: #{tpu_custom_call.1} parent=1 // pred_check
      %p150 = pneg %p55
    $region35: #{tpu_custom_call.1} parent=1 // pred_check_branch
      %152 = sbr.rel (%p150) target = $region37
    $region36: #{tpu_custom_call.1} parent=1 // pred_region
      %v153 = vld [vmem:[#allocation6] sm:$0xff]
      %v154 = vld [vmem:[#allocation2] sm:$0xff]
      %v155 = vadd.f32 %v153, %v154
      %v156 = vld [vmem:[%s3] sm:$0x1]
      %v158 = vlaneseq
      %v159 = vshrl.u32 %v158, 7
      %v160 = vsub.s32 0, %v159
      %v161 = vrot.slane %v156, %v160
      %v163 = vadd.f32 %v155, %v161
      %164 = vst [vmem:[#allocation9] sm:$0xff] %v163
    $region37: #{tpu_custom_call.1} parent=1 // pred_fallthru
      _
    // Predicated region
    $region38: #{tpu_custom_call.1} parent=1 // pred_check
      _
    $region39: #{tpu_custom_call.1} parent=1 // pred_check_branch
      %166 = sbr.rel (0) target = $region41
    $region40: #{tpu_custom_call.1} parent=1 // pred_region
      %s168 = ssub.s32 128, 128
      %169 = vsyncadd [#allocation5], %s168
      %s171 = sshll.u32 [#allocation9], 4
      %s172 = int_to_ptr.vmem [resolvable:$true] %s171
      %174 = dma.vmem_to_hbm [thread:$0]  %s172, 128, %s4, [#allocation5]
    $region41: #{tpu_custom_call.1} parent=1 // pred_fallthru
      _
    // Predicated region
    $region42: #{tpu_custom_call.1} parent=1 // pred_check
      _
    $region43: #{tpu_custom_call.1} parent=1 // pred_check_branch
      %176 = sbr.rel (0) target = $region45
    $region44: #{tpu_custom_call.1} parent=1 // pred_region
      %177 = dma.done [#allocation5], 128
    $region45: #{tpu_custom_call.1} parent=1 // pred_fallthru
      _
    %178 = vsyncpa [#allocation4], 1
    %179 = vsyncpa [#allocation7], 1
    %180 = vsyncpa [#allocation5], 1

</llo_original>
